<compile_context>
chip_gen: v5e
topology: v5e:2x2
jax: 0.10.0
libtpu: 0.0.40
codegen_flags: <defaults>
</compile_context>

<pallas_src>
from functools import partial

import jax
import jax.numpy as jnp
from jax.experimental import pallas as pl
from jax.experimental.pallas import tpu as pltpu

_LANE = 128
_NO_GRID_MAX_ROWS = 4096   # <= this many rows: single VMEM-resident call (~4.4 MB)
_MAX_BLOCK_B = 2048        # grid path tile cap: ~6.3 MB double-buffered (v5e-safe)
_MIN_BLOCK_B = 512


def _round_up(n, m):
    return ((n + m - 1) // m) * m


def dqn_kernel(x_ref, w1_ref, b1_ref, w2_ref, b2_ref, out_ref):
    """Fused fc1 -> relu -> fc2 on one VMEM-resident batch tile.

    x_ref  : (Bt, S)   input states
    w1_ref : (S, Hp)   fc1 weight, (in, out) layout, hidden padded to 128
    b1_ref : (1, Hp)   fc1 bias (zero padded)
    w2_ref : (Hp, Op)  fc2 weight, (in, out) layout, output padded to 256
    b2_ref : (1, Op)   fc2 bias (zero padded)
    out_ref: (Bt, Op)  Q-values; padded lanes [O:Op) are exactly 0
    """
    x = x_ref[...]
    s_dim = x_ref.shape[1]          # static (e.g. 4)

    # fc1 as S rank-1 VPU updates: avoids an MXU weight load for a K=4,
    # mostly-zero weight and keeps the MXU free for the fc2 matmul only.
    # Exact f32 FMA on the VPU (matches nn.Linear).
    h = x[:, 0:1] * w1_ref[0:1, :] + b1_ref[...]
    for s in range(1, s_dim):       # tiny static trip count, unrolled at trace
        h = h + x[:, s:s + 1] * w1_ref[s:s + 1, :]
    h = jnp.maximum(h, 0.0)

    # fc2 on the MXU; HIGHEST precision gives true-f32 accumulation (cheap at
    # K=128 / N=256 while the kernel is HBM-writeback bound).
    o = jnp.dot(h, w2_ref[...],
                preferred_element_type=jnp.float32,
                precision=jax.lax.Precision.HIGHEST)
    out_ref[...] = (o + b2_ref[...]).astype(out_ref.dtype)


def prepare_params(w1, b1, w2, b2):
    """One-time conversion of PyTorch-layout params into padded kernel layout.

    w1: (H, S), b1: (H,), w2: (O, H), b2: (O,)  ->  w1_t (S, Hp), b1 (1, Hp),
    w2_t (Hp, Op), b2 (1, Op), plus the true output dim O.
    """
    H, S = w1.shape
    O = w2.shape[0]
    Hp = _round_up(H, _LANE)
    Op = _round_up(O, _LANE)
    w1 = jnp.asarray(w1, jnp.float32)
    b1 = jnp.asarray(b1, jnp.float32)
    w2 = jnp.asarray(w2, jnp.float32)
    b2 = jnp.asarray(b2, jnp.float32)
    w1_t = jnp.zeros((S, Hp), jnp.float32).at[:, :H].set(w1.T)
    b1_p = jnp.zeros((1, Hp), jnp.float32).at[0, :H].set(b1)
    w2_t = jnp.zeros((Hp, Op), jnp.float32).at[:H, :O].set(w2.T)
    b2_p = jnp.zeros((1, Op), jnp.float32).at[0, :O].set(b2)
    return w1_t, b1_p, w2_t, b2_p, O


@partial(jax.jit, static_argnames=("out_dim", "return_padded"))
def dqn_forward(x, w1_t, b1, w2_t, b2, *, out_dim, return_padded=False):
    """Forward pass. x: (B, S) f32, params from prepare_params.

    Returns (B, out_dim), or the padded (B, Op) array when return_padded=True
    (padded lanes are exactly 0 — slice before any max/argmax over models).
    """
    B, S = x.shape
    Hp = w1_t.shape[1]
    Op = w2_t.shape[1]

    cost = pl.CostEstimate(
        flops=2 * B * (S * Hp + Hp * Op),
        transcendentals=0,
        bytes_accessed=4 * (B * S + S * Hp + Hp + Hp * Op + Op + B * Op),
    )

    if B <= _NO_GRID_MAX_ROWS:
        # Single invocation, everything VMEM-resident, no grid and no pipeline
        # machinery: zero per-step prologue/epilogue.  Footprint at 4096 rows
        # is ~4.4 MB, comfortably under every generation's scoped-VMEM default.
        vmem = pl.BlockSpec(memory_space=pltpu.MemorySpace.VMEM)
        out_p = pl.pallas_call(
            dqn_kernel,
            out_shape=jax.ShapeDtypeStruct((B, Op), jnp.float32),
            in_specs=[vmem, vmem, vmem, vmem, vmem],
            out_specs=vmem,
            cost_estimate=cost,
        )(x, w1_t, b1, w2_t, b2)
    else:
        # Large batch: tile B over a 1-D "parallel" grid.  Choose block_b so
        # the grid has >= 4 steps (>= 2 per TensorCore on v7x, restoring DMA /
        # compute overlap per core) but cap at 2048 rows so the double-buffered
        # working set (~6.3 MB) stays far below v5e's 16 MiB default scoped
        # VMEM.  Weights map to block (0, 0) every step -> VMEM resident.
        block_b = min(_MAX_BLOCK_B,
                      max(_MIN_BLOCK_B, _round_up(pl.cdiv(B, 4), _MIN_BLOCK_B)))
        grid = (pl.cdiv(B, block_b),)
        out_p = pl.pallas_call(
            dqn_kernel,
            out_shape=jax.ShapeDtypeStruct((B, Op), jnp.float32),
            grid=grid,
            in_specs=[
                pl.BlockSpec((block_b, S), lambda i: (i, 0)),
                pl.BlockSpec((S, Hp), lambda i: (0, 0)),
                pl.BlockSpec((1, Hp), lambda i: (0, 0)),
                pl.BlockSpec((Hp, Op), lambda i: (0, 0)),
                pl.BlockSpec((1, Op), lambda i: (0, 0)),
            ],
            out_specs=pl.BlockSpec((block_b, Op), lambda i: (i, 0)),
            compiler_params=pltpu.CompilerParams(
                dimension_semantics=("parallel",)
            ),
            cost_estimate=cost,
        )(x, w1_t, b1, w2_t, b2)

    if return_padded:
        # Skips the extra HBM round-trip of the slice; consumer must ignore
        # (or slice off) the zero-padded lanes before reducing over them.
        return out_p
    return out_p[:, :out_dim]


def init_params(key, state_space_dim, action_space_dim, hidden, no_models):
    """PyTorch nn.Linear default init: U(-1/sqrt(fan_in), 1/sqrt(fan_in))."""
    out_dim = action_space_dim * no_models
    k1, k2, k3, k4 = jax.random.split(key, 4)
    bound1 = 1.0 / jnp.sqrt(jnp.float32(state_space_dim))
    bound2 = 1.0 / jnp.sqrt(jnp.float32(hidden))
    w1 = jax.random.uniform(k1, (hidden, state_space_dim), jnp.float32, -bound1, bound1)
    b1 = jax.random.uniform(k2, (hidden,), jnp.float32, -bound1, bound1)
    w2 = jax.random.uniform(k3, (out_dim, hidden), jnp.float32, -bound2, bound2)
    b2 = jax.random.uniform(k4, (out_dim,), jnp.float32, -bound2, bound2)
    return w1, b1, w2, b2


if __name__ == "__main__":
    # Cartpole-like sizes: state=4, actions=2, hidden=12, no_models=100 (O=200).
    state_space_dim = 4
    action_space_dim = 2
    hidden = 12
    no_models = 100

    key = jax.random.PRNGKey(0)
    kx, kx2, kp = jax.random.split(key, 3)
    w1, b1, w2, b2 = init_params(kp, state_space_dim, action_space_dim,
                                 hidden, no_models)
    # One-time layout conversion (kept across all forward calls).
    w1_t, b1_p, w2_t, b2_p, out_dim = prepare_params(w1, b1, w2, b2)

    def ref_fwd(x):
        return jnp.maximum(x @ w1.T + b1, 0.0) @ w2.T + b2

    # Small batch -> single-invocation (no-grid, fully VMEM-resident) path.
    x_small = jax.random.normal(kx, (8, state_space_dim), jnp.float32)
    out_small = jax.block_until_ready(
        dqn_forward(x_small, w1_t, b1_p, w2_t, b2_p, out_dim=out_dim))
    assert out_small.shape == (8, action_space_dim * no_models)
    assert jnp.allclose(out_small, ref_fwd(x_small), atol=1e-5, rtol=1e-5)

    # Large (replay-buffer-sized) batch -> batch-tiled "parallel" grid path.
    # 4100 is deliberately not a multiple of the tile to exercise tail masking.
    x_big = jax.random.normal(kx2, (4100, state_space_dim), jnp.float32)
    out_big = jax.block_until_ready(
        dqn_forward(x_big, w1_t, b1_p, w2_t, b2_p, out_dim=out_dim))
    assert out_big.shape == (4100, action_space_dim * no_models)
    assert jnp.allclose(out_big, ref_fwd(x_big), atol=1e-4, rtol=1e-4)

    # Padded fast path (no post-kernel slice); padded lanes must be exactly 0.
    out_pad = jax.block_until_ready(
        dqn_forward(x_small, w1_t, b1_p, w2_t, b2_p,
                    out_dim=out_dim, return_padded=True))
    assert out_pad.shape[1] % _LANE == 0
    assert jnp.allclose(out_pad[:, :out_dim], ref_fwd(x_small), atol=1e-5, rtol=1e-5)
    assert jnp.all(out_pad[:, out_dim:] == 0.0)

    print("KERNEL_OK")
</pallas_src>

<mosaic_0001>
module attributes {stable_mosaic.version = 11 : i64} {
  func.func @dqn_kernel(%arg0: memref<8x4xf32, #tpu.memory_space<vmem>>, %arg1: memref<4x128xf32, #tpu.memory_space<vmem>>, %arg2: memref<1x128xf32, #tpu.memory_space<vmem>>, %arg3: memref<128x256xf32, #tpu.memory_space<vmem>>, %arg4: memref<1x256xf32, #tpu.memory_space<vmem>>, %arg5: memref<8x256xf32, #tpu.memory_space<vmem>>) attributes {dimension_semantics = [], scalar_prefetch = 0 : i64, scratch_operands = 0 : i64, tpu.core_type = #tpu.core_type<tc>} {
    %c0 = arith.constant 0 : index
    %c0_0 = arith.constant 0 : index
    %0 = vector.load %arg0[%c0, %c0_0] : memref<8x4xf32, #tpu.memory_space<vmem>>, vector<8x4xf32>
    %1 = vector.extract_strided_slice %0 {offsets = [0, 0], sizes = [8, 1], strides = [1, 1]} : vector<8x4xf32> to vector<8x1xf32>
    %c0_1 = arith.constant 0 : index
    %c0_2 = arith.constant 0 : index
    %2 = vector.load %arg1[%c0_1, %c0_2] : memref<4x128xf32, #tpu.memory_space<vmem>>, vector<1x128xf32>
    %3 = vector.broadcast %1 : vector<8x1xf32> to vector<8x128xf32>
    %4 = vector.broadcast %2 : vector<1x128xf32> to vector<8x128xf32>
    %5 = arith.mulf %3, %4 : vector<8x128xf32>
    %c0_3 = arith.constant 0 : index
    %c0_4 = arith.constant 0 : index
    %6 = vector.load %arg2[%c0_3, %c0_4] : memref<1x128xf32, #tpu.memory_space<vmem>>, vector<1x128xf32>
    %7 = vector.broadcast %6 : vector<1x128xf32> to vector<8x128xf32>
    %8 = arith.addf %5, %7 : vector<8x128xf32>
    %9 = vector.extract_strided_slice %0 {offsets = [0, 1], sizes = [8, 1], strides = [1, 1]} : vector<8x4xf32> to vector<8x1xf32>
    %c1 = arith.constant 1 : index
    %c0_5 = arith.constant 0 : index
    %10 = vector.load %arg1[%c1, %c0_5] : memref<4x128xf32, #tpu.memory_space<vmem>>, vector<1x128xf32>
    %11 = vector.broadcast %9 : vector<8x1xf32> to vector<8x128xf32>
    %12 = vector.broadcast %10 : vector<1x128xf32> to vector<8x128xf32>
    %13 = arith.mulf %11, %12 : vector<8x128xf32>
    %14 = arith.addf %8, %13 : vector<8x128xf32>
    %15 = vector.extract_strided_slice %0 {offsets = [0, 2], sizes = [8, 1], strides = [1, 1]} : vector<8x4xf32> to vector<8x1xf32>
    %c2 = arith.constant 2 : index
    %c0_6 = arith.constant 0 : index
    %16 = vector.load %arg1[%c2, %c0_6] : memref<4x128xf32, #tpu.memory_space<vmem>>, vector<1x128xf32>
    %17 = vector.broadcast %15 : vector<8x1xf32> to vector<8x128xf32>
    %18 = vector.broadcast %16 : vector<1x128xf32> to vector<8x128xf32>
    %19 = arith.mulf %17, %18 : vector<8x128xf32>
    %20 = arith.addf %14, %19 : vector<8x128xf32>
    %21 = vector.extract_strided_slice %0 {offsets = [0, 3], sizes = [8, 1], strides = [1, 1]} : vector<8x4xf32> to vector<8x1xf32>
    %c3 = arith.constant 3 : index
    %c0_7 = arith.constant 0 : index
    %22 = vector.load %arg1[%c3, %c0_7] : memref<4x128xf32, #tpu.memory_space<vmem>>, vector<1x128xf32>
    %23 = vector.broadcast %21 : vector<8x1xf32> to vector<8x128xf32>
    %24 = vector.broadcast %22 : vector<1x128xf32> to vector<8x128xf32>
    %25 = arith.mulf %23, %24 : vector<8x128xf32>
    %26 = arith.addf %20, %25 : vector<8x128xf32>
    %cst = arith.constant 0.000000e+00 : f32
    %27 = vector.broadcast %cst : f32 to vector<8x128xf32>
    %28 = arith.maximumf %26, %27 : vector<8x128xf32>
    %c0_8 = arith.constant 0 : index
    %c0_9 = arith.constant 0 : index
    %29 = vector.load %arg3[%c0_8, %c0_9] : memref<128x256xf32, #tpu.memory_space<vmem>>, vector<128x256xf32>
    %cst_10 = arith.constant dense<0.000000e+00> : vector<8x256xf32>
    %30 = tpu.matmul %28, %29, %cst_10 {dimension_numbers = #tpu.dot_dimension_numbers<[1], [0], [0], [1], [0, 0, 1, 1], [], []>, precision = #tpu.contract_precision<fp32>} : vector<8x128xf32>, vector<128x256xf32>, vector<8x256xf32> -> vector<8x256xf32>
    %c0_11 = arith.constant 0 : index
    %c0_12 = arith.constant 0 : index
    %31 = vector.load %arg4[%c0_11, %c0_12] : memref<1x256xf32, #tpu.memory_space<vmem>>, vector<1x256xf32>
    %32 = vector.broadcast %31 : vector<1x256xf32> to vector<8x256xf32>
    %33 = arith.addf %30, %32 : vector<8x256xf32>
    %c0_13 = arith.constant 0 : index
    %c0_14 = arith.constant 0 : index
    %34 = vector.load %arg5[%c0_13, %c0_14] : memref<8x256xf32, #tpu.memory_space<vmem>>, vector<8x256xf32>
    tpu.vector_store %arg5[%c0_13, %c0_14], %33 {strides = array<i32>} : memref<8x256xf32, #tpu.memory_space<vmem>>, vector<8x256xf32>,
    return
  }
}

</mosaic_0001>

<llo_original>
// kernel: dqn_forward.1
$region0: #{dqn_forward.1}
  #allocation0 [shape = 'u32[]', space=smem, size = 0x4, offset = 0x4, fixed_abs, tag = 'smem constant byte address 0x4 - core index']
  #allocation1 [shape = 'u32[72,128]{1,0:T(1,128)}', space=vmem, size = 0x9000, scoped, tag = 'internal scratch']
  %s0 = inlined_call_operand.vmem [shape: f32[8,4], index: 0, kind: input, shape index: {}]
  %s1 = inlined_call_operand.vmem [shape: f32[4,128], index: 1, kind: input, shape index: {}]
  %s2 = inlined_call_operand.vmem [shape: f32[1,128], index: 2, kind: input, shape index: {}]
  %s3 = inlined_call_operand.hbm [shape: f32[128,256], index: 3, kind: input, shape index: {}]
  %s4 = inlined_call_operand.vmem [shape: f32[1,256], index: 4, kind: input, shape index: {}]
  %s5 = inlined_call_operand.hbm [shape: f32[8,256], index: 5, kind: output, shape index: {}]
  %s6 = sld [smem:[#allocation0]]
  $region34: #{dqn_forward.1} parent=0
    _
  %s8 = ssub.s32 1, %s6
  %s9 = scalar_select 0, %s8, %s6
  $region1: #{dqn_forward.1} parent=0
    #allocation2 [shape = 'u8[131072]{0}', space=vmem, size = 0x20000, scoped, tag = 'input window, operand 3, single buffered']
    #allocation3 [shape = 's32[1]{0}', space=sflag, size = 0x4, scoped, tag = 'scoped memory for dqn_forward.1']
    #allocation4 [shape = 's32[1]{0}', space=sflag, size = 0x4, scoped, tag = 'scoped memory for dqn_forward.1']
    #allocation5 [shape = 'u8[8192]{0}', space=vmem, size = 0x2000, scoped, tag = 'output window, operand 0, single buffered']
    %10 = vsyncpa [#allocation3], 0
    %11 = vsyncpa [#allocation4], 0
    // Predicated region
    $region2: #{dqn_forward.1} parent=1 // pred_check
      _
    $region3: #{dqn_forward.1} parent=1 // pred_check_branch
      %13 = sbr.rel (0) target = $region5
    $region4: #{dqn_forward.1} parent=1 // pred_region
      _
    $region5: #{dqn_forward.1} parent=1 // pred_fallthru
      _
    // Predicated region
    $region6: #{dqn_forward.1} parent=1 // pred_check
      _
    $region7: #{dqn_forward.1} parent=1 // pred_check_branch
      %15 = sbr.rel (0) target = $region9
    $region8: #{dqn_forward.1} parent=1 // pred_region
      _
    $region9: #{dqn_forward.1} parent=1 // pred_fallthru
      _
    // Predicated region
    $region10: #{dqn_forward.1} parent=1 // pred_check
      _
    $region11: #{dqn_forward.1} parent=1 // pred_check_branch
      %17 = sbr.rel (0) target = $region13
    $region12: #{dqn_forward.1} parent=1 // pred_region
      _
    $region13: #{dqn_forward.1} parent=1 // pred_fallthru
      _
    // Predicated region
    $region14: #{dqn_forward.1} parent=1 // pred_check
      _
    $region15: #{dqn_forward.1} parent=1 // pred_check_branch
      %19 = sbr.rel (0) target = $region17
    $region16: #{dqn_forward.1} parent=1 // pred_region
      %21 = vsyncadd [#allocation3], 0
      %s22 = sshll.u32 %s3, 4
      %s23 = int_to_ptr.hbm [resolvable:$true] %s22
      %s24 = sshll.u32 [#allocation2], 4
      %s25 = int_to_ptr.vmem [resolvable:$true] %s24
      %30 = dma.hbm_to_vmem [thread:$0]  %s23, 4096, %s25, [#allocation3], 256, 256, 16
    $region17: #{dqn_forward.1} parent=1 // pred_fallthru
      _
    // Predicated region
    $region18: #{dqn_forward.1} parent=1 // pred_check
      _
    $region19: #{dqn_forward.1} parent=1 // pred_check_branch
      %32 = sbr.rel (0) target = $region21
    $region20: #{dqn_forward.1} parent=1 // pred_region
      _
    $region21: #{dqn_forward.1} parent=1 // pred_fallthru
      _
    // Predicated region
    $region22: #{dqn_forward.1} parent=1 // pred_check
      _
    $region23: #{dqn_forward.1} parent=1 // pred_check_branch
      %34 = sbr.rel (0) target = $region25
    $region24: #{dqn_forward.1} parent=1 // pred_region
      %36 = dma.done [#allocation3], 4096
    $region25: #{dqn_forward.1} parent=1 // pred_fallthru
      _
    %v37 = vld [vmem:[%s0] sm:$0xff]
    %v38 = vld [vmem:[%s1] sm:$0x1]
    %40 = vset.pattern.permute.xlu0 0
    %41 = vperm.xlu0 %40, %v37
    %v42 = vpop.permute.xlu0 %41
    %v44 = vperm.slane %v38, 0
    %v45 = vmul.f32 %v42, %v44
    %v46 = vld [vmem:[%s2] sm:$0x1]
    %v48 = vperm.slane %v46, 0
    %v50 = vadd.f32 %v45, %v48
    %v51 = vld [vmem:[%s1 + $0x1] sm:$0x1]
    %52 = vset.pattern.permute.xlu0 1
    %53 = vperm.xlu0 %52, %v37
    %v54 = vpop.permute.xlu0 %53
    %v56 = vperm.slane %v51, 0
    %v57 = vmul.f32 %v54, %v56
    %v58 = vadd.f32 %v50, %v57
    %v59 = vld [vmem:[%s1 + $0x2] sm:$0x1]
    %60 = vset.pattern.permute.xlu0 2
    %61 = vperm.xlu0 %60, %v37
    %v62 = vpop.permute.xlu0 %61
    %v64 = vperm.slane %v59, 0
    %v65 = vmul.f32 %v62, %v64
    %v66 = vadd.f32 %v58, %v65
    %v67 = vld [vmem:[%s1 + $0x3] sm:$0x1]
    %68 = vset.pattern.permute.xlu0 3
    %69 = vperm.xlu0 %68, %v37
    %v70 = vpop.permute.xlu0 %69
    %v72 = vperm.slane %v67, 0
    %v73 = vmul.f32 %v70, %v72
    %v74 = vadd.f32 %v66, %v73
    %v75 = vmax.f32 %v74, 0.0
    %v76 = vld [vmem:[#allocation2] sm:$0xff]
    %v77 = vld [vmem:[#allocation2 + $0x8] sm:$0xff]
    %v78 = vld [vmem:[#allocation2 + $0x10] sm:$0xff]
    %v79 = vld [vmem:[#allocation2 + $0x18] sm:$0xff]
    %v80 = vld [vmem:[#allocation2 + $0x20] sm:$0xff]
    %v81 = vld [vmem:[#allocation2 + $0x28] sm:$0xff]
    %v82 = vld [vmem:[#allocation2 + $0x30] sm:$0xff]
    %v83 = vld [vmem:[#allocation2 + $0x38] sm:$0xff]
    %v84 = vld [vmem:[#allocation2 + $0x40] sm:$0xff]
    %v85 = vld [vmem:[#allocation2 + $0x48] sm:$0xff]
    %v86 = vld [vmem:[#allocation2 + $0x50] sm:$0xff]
    %v87 = vld [vmem:[#allocation2 + $0x58] sm:$0xff]
    %v88 = vld [vmem:[#allocation2 + $0x60] sm:$0xff]
    %v89 = vld [vmem:[#allocation2 + $0x68] sm:$0xff]
    %v90 = vld [vmem:[#allocation2 + $0x70] sm:$0xff]
    %v91 = vld [vmem:[#allocation2 + $0x78] sm:$0xff]
    %v92 = vld [vmem:[#allocation2 + $0x80] sm:$0xff]
    %v93 = vld [vmem:[#allocation2 + $0x88] sm:$0xff]
    %v94 = vld [vmem:[#allocation2 + $0x90] sm:$0xff]
    %v95 = vld [vmem:[#allocation2 + $0x98] sm:$0xff]
    %v96 = vld [vmem:[#allocation2 + $0xa0] sm:$0xff]
    %v97 = vld [vmem:[#allocation2 + $0xa8] sm:$0xff]
    %v98 = vld [vmem:[#allocation2 + $0xb0] sm:$0xff]
    %v99 = vld [vmem:[#allocation2 + $0xb8] sm:$0xff]
    %v100 = vld [vmem:[#allocation2 + $0xc0] sm:$0xff]
    %v101 = vld [vmem:[#allocation2 + $0xc8] sm:$0xff]
    %v102 = vld [vmem:[#allocation2 + $0xd0] sm:$0xff]
    %v103 = vld [vmem:[#allocation2 + $0xd8] sm:$0xff]
    %v104 = vld [vmem:[#allocation2 + $0xe0] sm:$0xff]
    %v105 = vld [vmem:[#allocation2 + $0xe8] sm:$0xff]
    %v106 = vld [vmem:[#allocation2 + $0xf0] sm:$0xff]
    %v107 = vld [vmem:[#allocation2 + $0xf8] sm:$0xff]
    %v108 = vld [vmem:[%s4] sm:$0x3]
    %v110 = vperm.slane %v108, 0
    %v111 = vperm.slane %v108, 1
    %v114 = vand.u32 %v106, 4294901760
    %115 = vmatpush.msra.mxu0 %v114
    %v116 = vand.u32 %v104, 4294901760
    %117 = vmatpush.msra.mxu0 %v116
    %v118 = vand.u32 %v102, 4294901760
    %119 = vmatpush.msra.mxu0 %v118
    %v120 = vand.u32 %v100, 4294901760
    %121 = vmatpush.msra.mxu0 %v120
    %v122 = vand.u32 %v98, 4294901760
    %123 = vmatpush.msra.mxu0 %v122
    %v124 = vand.u32 %v96, 4294901760
    %125 = vmatpush.msra.mxu0 %v124
    %v126 = vand.u32 %v94, 4294901760
    %127 = vmatpush.msra.mxu0 %v126
    %v128 = vand.u32 %v92, 4294901760
    %129 = vmatpush.msra.mxu0 %v128
    %v130 = vand.u32 %v90, 4294901760
    %131 = vmatpush.msra.mxu0 %v130
    %v132 = vand.u32 %v88, 4294901760
    %133 = vmatpush.msra.mxu0 %v132
    %v134 = vand.u32 %v86, 4294901760
    %135 = vmatpush.msra.mxu0 %v134
    %v136 = vand.u32 %v84, 4294901760
    %137 = vmatpush.msra.mxu0 %v136
    %v138 = vand.u32 %v82, 4294901760
    %139 = vmatpush.msra.mxu0 %v138
    %v140 = vand.u32 %v80, 4294901760
    %141 = vmatpush.msra.mxu0 %v140
    %v142 = vand.u32 %v78, 4294901760
    %143 = vmatpush.msra.mxu0 %v142
    %v144 = vand.u32 %v76, 4294901760
    %145 = vmatpush.msra.mxu0 %v144
    %v146 = vand.u32 %v75, 4294901760
    %v147 = vsub.f32 %v75, %v146
    %v148 = vand.u32 %v147, 4294901760
    %v149 = vsub.f32 %v147, %v148
    %v150 = vand.u32 %v149, 4294901760
    %151 = vmatmul.f32.gmra.mxu0 %v150
    %v152 = vpop.f32.mrf.mxu0
    %v153 = vadd.f32 %v110, %v152
    %154 = vdwg.mxu0
    %v155 = vand.u32 %v106, 4294901760
    %v156 = vsub.f32 %v106, %v155
    %v157 = vand.u32 %v156, 4294901760
    %v158 = vsub.f32 %v156, %v157
    %v159 = vand.u32 %v158, 4294901760
    %160 = vmatpush.msra.mxu0 %v159
    %v161 = vand.u32 %v104, 4294901760
    %v162 = vsub.f32 %v104, %v161
    %v163 = vand.u32 %v162, 4294901760
    %v164 = vsub.f32 %v162, %v163
    %v165 = vand.u32 %v164, 4294901760
    %166 = vmatpush.msra.mxu0 %v165
    %v167 = vand.u32 %v102, 4294901760
    %v168 = vsub.f32 %v102, %v167
    %v169 = vand.u32 %v168, 4294901760
    %v170 = vsub.f32 %v168, %v169
    %v171 = vand.u32 %v170, 4294901760
    %172 = vmatpush.msra.mxu0 %v171
    %v173 = vand.u32 %v100, 4294901760
    %v174 = vsub.f32 %v100, %v173
    %v175 = vand.u32 %v174, 4294901760
    %v176 = vsub.f32 %v174, %v175
    %v177 = vand.u32 %v176, 4294901760
    %178 = vmatpush.msra.mxu0 %v177
    %v179 = vand.u32 %v98, 4294901760
    %v180 = vsub.f32 %v98, %v179
    %v181 = vand.u32 %v180, 4294901760
    %v182 = vsub.f32 %v180, %v181
    %v183 = vand.u32 %v182, 4294901760
    %184 = vmatpush.msra.mxu0 %v183
    %v185 = vand.u32 %v96, 4294901760
    %v186 = vsub.f32 %v96, %v185
    %v187 = vand.u32 %v186, 4294901760
    %v188 = vsub.f32 %v186, %v187
    %v189 = vand.u32 %v188, 4294901760
    %190 = vmatpush.msra.mxu0 %v189
    %v191 = vand.u32 %v94, 4294901760
    %v192 = vsub.f32 %v94, %v191
    %v193 = vand.u32 %v192, 4294901760
    %v194 = vsub.f32 %v192, %v193
    %v195 = vand.u32 %v194, 4294901760
    %196 = vmatpush.msra.mxu0 %v195
    %v197 = vand.u32 %v92, 4294901760
    %v198 = vsub.f32 %v92, %v197
    %v199 = vand.u32 %v198, 4294901760
    %v200 = vsub.f32 %v198, %v199
    %v201 = vand.u32 %v200, 4294901760
    %202 = vmatpush.msra.mxu0 %v201
    %v203 = vand.u32 %v90, 4294901760
    %v204 = vsub.f32 %v90, %v203
    %v205 = vand.u32 %v204, 4294901760
    %v206 = vsub.f32 %v204, %v205
    %v207 = vand.u32 %v206, 4294901760
    %208 = vmatpush.msra.mxu0 %v207
    %v209 = vand.u32 %v88, 4294901760
    %v210 = vsub.f32 %v88, %v209
    %v211 = vand.u32 %v210, 4294901760
    %v212 = vsub.f32 %v210, %v211
    %v213 = vand.u32 %v212, 4294901760
    %214 = vmatpush.msra.mxu0 %v213
    %v215 = vand.u32 %v86, 4294901760
    %v216 = vsub.f32 %v86, %v215
    %v217 = vand.u32 %v216, 4294901760
    %v218 = vsub.f32 %v216, %v217
    %v219 = vand.u32 %v218, 4294901760
    %220 = vmatpush.msra.mxu0 %v219
    %v221 = vand.u32 %v84, 4294901760
    %v222 = vsub.f32 %v84, %v221
    %v223 = vand.u32 %v222, 4294901760
    %v224 = vsub.f32 %v222, %v223
    %v225 = vand.u32 %v224, 4294901760
    %226 = vmatpush.msra.mxu0 %v225
    %v227 = vand.u32 %v82, 4294901760
    %v228 = vsub.f32 %v82, %v227
    %v229 = vand.u32 %v228, 4294901760
    %v230 = vsub.f32 %v228, %v229
    %v231 = vand.u32 %v230, 4294901760
    %232 = vmatpush.msra.mxu0 %v231
    %v233 = vand.u32 %v80, 4294901760
    %v234 = vsub.f32 %v80, %v233
    %v235 = vand.u32 %v234, 4294901760
    %v236 = vsub.f32 %v234, %v235
    %v237 = vand.u32 %v236, 4294901760
    %238 = vmatpush.msra.mxu0 %v237
    %v239 = vand.u32 %v78, 4294901760
    %v240 = vsub.f32 %v78, %v239
    %v241 = vand.u32 %v240, 4294901760
    %v242 = vsub.f32 %v240, %v241
    %v243 = vand.u32 %v242, 4294901760
    %244 = vmatpush.msra.mxu0 %v243
    %v245 = vand.u32 %v76, 4294901760
    %v246 = vsub.f32 %v76, %v245
    %v247 = vand.u32 %v246, 4294901760
    %v248 = vsub.f32 %v246, %v247
    %v249 = vand.u32 %v248, 4294901760
    %250 = vmatpush.msra.mxu0 %v249
    %v251 = vand.u32 %v75, 4294901760
    %252 = vmatmul.f32.gmra.mxu0 %v251
    %v253 = vpop.f32.mrf.mxu0
    %v254 = vadd.f32 %v153, %v253
    %255 = vdwg.mxu0
    %v256 = vand.u32 %v106, 4294901760
    %v257 = vsub.f32 %v106, %v256
    %258 = vmatpush.msra.mxu0 %v257
    %v259 = vand.u32 %v104, 4294901760
    %v260 = vsub.f32 %v104, %v259
    %261 = vmatpush.msra.mxu0 %v260
    %v262 = vand.u32 %v102, 4294901760
    %v263 = vsub.f32 %v102, %v262
    %264 = vmatpush.msra.mxu0 %v263
    %v265 = vand.u32 %v100, 4294901760
    %v266 = vsub.f32 %v100, %v265
    %267 = vmatpush.msra.mxu0 %v266
    %v268 = vand.u32 %v98, 4294901760
    %v269 = vsub.f32 %v98, %v268
    %270 = vmatpush.msra.mxu0 %v269
    %v271 = vand.u32 %v96, 4294901760
    %v272 = vsub.f32 %v96, %v271
    %273 = vmatpush.msra.mxu0 %v272
    %v274 = vand.u32 %v94, 4294901760
    %v275 = vsub.f32 %v94, %v274
    %276 = vmatpush.msra.mxu0 %v275
    %v277 = vand.u32 %v92, 4294901760
    %v278 = vsub.f32 %v92, %v277
    %279 = vmatpush.msra.mxu0 %v278
    %v280 = vand.u32 %v90, 4294901760
    %v281 = vsub.f32 %v90, %v280
    %282 = vmatpush.msra.mxu0 %v281
    %v283 = vand.u32 %v88, 4294901760
    %v284 = vsub.f32 %v88, %v283
    %285 = vmatpush.msra.mxu0 %v284
    %v286 = vand.u32 %v86, 4294901760
    %v287 = vsub.f32 %v86, %v286
    %288 = vmatpush.msra.mxu0 %v287
    %v289 = vand.u32 %v84, 4294901760
    %v290 = vsub.f32 %v84, %v289
    %291 = vmatpush.msra.mxu0 %v290
    %v292 = vand.u32 %v82, 4294901760
    %v293 = vsub.f32 %v82, %v292
    %294 = vmatpush.msra.mxu0 %v293
    %v295 = vand.u32 %v80, 4294901760
    %v296 = vsub.f32 %v80, %v295
    %297 = vmatpush.msra.mxu0 %v296
    %v298 = vand.u32 %v78, 4294901760
    %v299 = vsub.f32 %v78, %v298
    %300 = vmatpush.msra.mxu0 %v299
    %v301 = vand.u32 %v76, 4294901760
    %v302 = vsub.f32 %v76, %v301
    %303 = vmatpush.msra.mxu0 %v302
    %v304 = vand.u32 %v75, 4294901760
    %v305 = vsub.f32 %v75, %v304
    %306 = vmatmul.f32.gmra.mxu0 %v305
    %v307 = vpop.f32.mrf.mxu0
    %v308 = vadd.f32 %v254, %v307
    %309 = vdwg.mxu0
    %v310 = vand.u32 %v106, 4294901760
    %311 = vmatpush.msra.mxu0 %v310
    %v312 = vand.u32 %v104, 4294901760
    %313 = vmatpush.msra.mxu0 %v312
    %v314 = vand.u32 %v102, 4294901760
    %315 = vmatpush.msra.mxu0 %v314
    %v316 = vand.u32 %v100, 4294901760
    %317 = vmatpush.msra.mxu0 %v316
    %v318 = vand.u32 %v98, 4294901760
    %319 = vmatpush.msra.mxu0 %v318
    %v320 = vand.u32 %v96, 4294901760
    %321 = vmatpush.msra.mxu0 %v320
    %v322 = vand.u32 %v94, 4294901760
    %323 = vmatpush.msra.mxu0 %v322
    %v324 = vand.u32 %v92, 4294901760
    %325 = vmatpush.msra.mxu0 %v324
    %v326 = vand.u32 %v90, 4294901760
    %327 = vmatpush.msra.mxu0 %v326
    %v328 = vand.u32 %v88, 4294901760
    %329 = vmatpush.msra.mxu0 %v328
    %v330 = vand.u32 %v86, 4294901760
    %331 = vmatpush.msra.mxu0 %v330
    %v332 = vand.u32 %v84, 4294901760
    %333 = vmatpush.msra.mxu0 %v332
    %v334 = vand.u32 %v82, 4294901760
    %335 = vmatpush.msra.mxu0 %v334
    %v336 = vand.u32 %v80, 4294901760
    %337 = vmatpush.msra.mxu0 %v336
    %v338 = vand.u32 %v78, 4294901760
    %339 = vmatpush.msra.mxu0 %v338
    %v340 = vand.u32 %v76, 4294901760
    %341 = vmatpush.msra.mxu0 %v340
    %v342 = vand.u32 %v75, 4294901760
    %v343 = vsub.f32 %v75, %v342
    %v344 = vand.u32 %v343, 4294901760
    %345 = vmatmul.f32.gmra.mxu0 %v344
    %v346 = vpop.f32.mrf.mxu0
    %v347 = vadd.f32 %v308, %v346
    %348 = vdwg.mxu0
    %v349 = vand.u32 %v106, 4294901760
    %v350 = vsub.f32 %v106, %v349
    %v351 = vand.u32 %v350, 4294901760
    %352 = vmatpush.msra.mxu0 %v351
    %v353 = vand.u32 %v104, 4294901760
    %v354 = vsub.f32 %v104, %v353
    %v355 = vand.u32 %v354, 4294901760
    %356 = vmatpush.msra.mxu0 %v355
    %v357 = vand.u32 %v102, 4294901760
    %v358 = vsub.f32 %v102, %v357
    %v359 = vand.u32 %v358, 4294901760
    %360 = vmatpush.msra.mxu0 %v359
    %v361 = vand.u32 %v100, 4294901760
    %v362 = vsub.f32 %v100, %v361
    %v363 = vand.u32 %v362, 4294901760
    %364 = vmatpush.msra.mxu0 %v363
    %v365 = vand.u32 %v98, 4294901760
    %v366 = vsub.f32 %v98, %v365
    %v367 = vand.u32 %v366, 4294901760
    %368 = vmatpush.msra.mxu0 %v367
    %v369 = vand.u32 %v96, 4294901760
    %v370 = vsub.f32 %v96, %v369
    %v371 = vand.u32 %v370, 4294901760
    %372 = vmatpush.msra.mxu0 %v371
    %v373 = vand.u32 %v94, 4294901760
    %v374 = vsub.f32 %v94, %v373
    %v375 = vand.u32 %v374, 4294901760
    %376 = vmatpush.msra.mxu0 %v375
    %v377 = vand.u32 %v92, 4294901760
    %v378 = vsub.f32 %v92, %v377
    %v379 = vand.u32 %v378, 4294901760
    %380 = vmatpush.msra.mxu0 %v379
    %v381 = vand.u32 %v90, 4294901760
    %v382 = vsub.f32 %v90, %v381
    %v383 = vand.u32 %v382, 4294901760
    %384 = vmatpush.msra.mxu0 %v383
    %v385 = vand.u32 %v88, 4294901760
    %v386 = vsub.f32 %v88, %v385
    %v387 = vand.u32 %v386, 4294901760
    %388 = vmatpush.msra.mxu0 %v387
    %v389 = vand.u32 %v86, 4294901760
    %v390 = vsub.f32 %v86, %v389
    %v391 = vand.u32 %v390, 4294901760
    %392 = vmatpush.msra.mxu0 %v391
    %v393 = vand.u32 %v84, 4294901760
    %v394 = vsub.f32 %v84, %v393
    %v395 = vand.u32 %v394, 4294901760
    %396 = vmatpush.msra.mxu0 %v395
    %v397 = vand.u32 %v82, 4294901760
    %v398 = vsub.f32 %v82, %v397
    %v399 = vand.u32 %v398, 4294901760
    %400 = vmatpush.msra.mxu0 %v399
    %v401 = vand.u32 %v80, 4294901760
    %v402 = vsub.f32 %v80, %v401
    %v403 = vand.u32 %v402, 4294901760
    %404 = vmatpush.msra.mxu0 %v403
    %v405 = vand.u32 %v78, 4294901760
    %v406 = vsub.f32 %v78, %v405
    %v407 = vand.u32 %v406, 4294901760
    %408 = vmatpush.msra.mxu0 %v407
    %v409 = vand.u32 %v76, 4294901760
    %v410 = vsub.f32 %v76, %v409
    %v411 = vand.u32 %v410, 4294901760
    %412 = vmatpush.msra.mxu0 %v411
    %v413 = vand.u32 %v75, 4294901760
    %414 = vmatmul.f32.gmra.mxu0 %v413
    %v415 = vpop.f32.mrf.mxu0
    %v416 = vadd.f32 %v347, %v415
    %417 = vdwg.mxu0
    %v418 = vand.u32 %v106, 4294901760
    %419 = vmatpush.msra.mxu0 %v418
    %v420 = vand.u32 %v104, 4294901760
    %421 = vmatpush.msra.mxu0 %v420
    %v422 = vand.u32 %v102, 4294901760
    %423 = vmatpush.msra.mxu0 %v422
    %v424 = vand.u32 %v100, 4294901760
    %425 = vmatpush.msra.mxu0 %v424
    %v426 = vand.u32 %v98, 4294901760
    %427 = vmatpush.msra.mxu0 %v426
    %v428 = vand.u32 %v96, 4294901760
    %429 = vmatpush.msra.mxu0 %v428
    %v430 = vand.u32 %v94, 4294901760
    %431 = vmatpush.msra.mxu0 %v430
    %v432 = vand.u32 %v92, 4294901760
    %433 = vmatpush.msra.mxu0 %v432
    %v434 = vand.u32 %v90, 4294901760
    %435 = vmatpush.msra.mxu0 %v434
    %v436 = vand.u32 %v88, 4294901760
    %437 = vmatpush.msra.mxu0 %v436
    %v438 = vand.u32 %v86, 4294901760
    %439 = vmatpush.msra.mxu0 %v438
    %v440 = vand.u32 %v84, 4294901760
    %441 = vmatpush.msra.mxu0 %v440
    %v442 = vand.u32 %v82, 4294901760
    %443 = vmatpush.msra.mxu0 %v442
    %v444 = vand.u32 %v80, 4294901760
    %445 = vmatpush.msra.mxu0 %v444
    %v446 = vand.u32 %v78, 4294901760
    %447 = vmatpush.msra.mxu0 %v446
    %v448 = vand.u32 %v76, 4294901760
    %449 = vmatpush.msra.mxu0 %v448
    %v450 = vand.u32 %v75, 4294901760
    %451 = vmatmul.f32.gmra.mxu0 %v450
    %v452 = vpop.f32.mrf.mxu0
    %v453 = vadd.f32 %v416, %v452
    %454 = vdwg.mxu0
    %v455 = vand.u32 %v107, 4294901760
    %456 = vmatpush.msra.mxu0 %v455
    %v457 = vand.u32 %v105, 4294901760
    %458 = vmatpush.msra.mxu0 %v457
    %v459 = vand.u32 %v103, 4294901760
    %460 = vmatpush.msra.mxu0 %v459
    %v461 = vand.u32 %v101, 4294901760
    %462 = vmatpush.msra.mxu0 %v461
    %v463 = vand.u32 %v99, 4294901760
    %464 = vmatpush.msra.mxu0 %v463
    %v465 = vand.u32 %v97, 4294901760
    %466 = vmatpush.msra.mxu0 %v465
    %v467 = vand.u32 %v95, 4294901760
    %468 = vmatpush.msra.mxu0 %v467
    %v469 = vand.u32 %v93, 4294901760
    %470 = vmatpush.msra.mxu0 %v469
    %v471 = vand.u32 %v91, 4294901760
    %472 = vmatpush.msra.mxu0 %v471
    %v473 = vand.u32 %v89, 4294901760
    %474 = vmatpush.msra.mxu0 %v473
    %v475 = vand.u32 %v87, 4294901760
    %476 = vmatpush.msra.mxu0 %v475
    %v477 = vand.u32 %v85, 4294901760
    %478 = vmatpush.msra.mxu0 %v477
    %v479 = vand.u32 %v83, 4294901760
    %480 = vmatpush.msra.mxu0 %v479
    %v481 = vand.u32 %v81, 4294901760
    %482 = vmatpush.msra.mxu0 %v481
    %v483 = vand.u32 %v79, 4294901760
    %484 = vmatpush.msra.mxu0 %v483
    %v485 = vand.u32 %v77, 4294901760
    %486 = vmatpush.msra.mxu0 %v485
    %v487 = vand.u32 %v75, 4294901760
    %v488 = vsub.f32 %v75, %v487
    %v489 = vand.u32 %v488, 4294901760
    %v490 = vsub.f32 %v488, %v489
    %v491 = vand.u32 %v490, 4294901760
    %492 = vmatmul.f32.gmra.mxu0 %v491
    %v493 = vpop.f32.mrf.mxu0
    %v494 = vadd.f32 %v111, %v493
    %495 = vdwg.mxu0
    %v496 = vand.u32 %v107, 4294901760
    %v497 = vsub.f32 %v107, %v496
    %v498 = vand.u32 %v497, 4294901760
    %v499 = vsub.f32 %v497, %v498
    %v500 = vand.u32 %v499, 4294901760
    %501 = vmatpush.msra.mxu0 %v500
    %v502 = vand.u32 %v105, 4294901760
    %v503 = vsub.f32 %v105, %v502
    %v504 = vand.u32 %v503, 4294901760
    %v505 = vsub.f32 %v503, %v504
    %v506 = vand.u32 %v505, 4294901760
    %507 = vmatpush.msra.mxu0 %v506
    %v508 = vand.u32 %v103, 4294901760
    %v509 = vsub.f32 %v103, %v508
    %v510 = vand.u32 %v509, 4294901760
    %v511 = vsub.f32 %v509, %v510
    %v512 = vand.u32 %v511, 4294901760
    %513 = vmatpush.msra.mxu0 %v512
    %v514 = vand.u32 %v101, 4294901760
    %v515 = vsub.f32 %v101, %v514
    %v516 = vand.u32 %v515, 4294901760
    %v517 = vsub.f32 %v515, %v516
    %v518 = vand.u32 %v517, 4294901760
    %519 = vmatpush.msra.mxu0 %v518
    %v520 = vand.u32 %v99, 4294901760
    %v521 = vsub.f32 %v99, %v520
    %v522 = vand.u32 %v521, 4294901760
    %v523 = vsub.f32 %v521, %v522
    %v524 = vand.u32 %v523, 4294901760
    %525 = vmatpush.msra.mxu0 %v524
    %v526 = vand.u32 %v97, 4294901760
    %v527 = vsub.f32 %v97, %v526
    %v528 = vand.u32 %v527, 4294901760
    %v529 = vsub.f32 %v527, %v528
    %v530 = vand.u32 %v529, 4294901760
    %531 = vmatpush.msra.mxu0 %v530
    %v532 = vand.u32 %v95, 4294901760
    %v533 = vsub.f32 %v95, %v532
    %v534 = vand.u32 %v533, 4294901760
    %v535 = vsub.f32 %v533, %v534
    %v536 = vand.u32 %v535, 4294901760
    %537 = vmatpush.msra.mxu0 %v536
    %v538 = vand.u32 %v93, 4294901760
    %v539 = vsub.f32 %v93, %v538
    %v540 = vand.u32 %v539, 4294901760
    %v541 = vsub.f32 %v539, %v540
    %v542 = vand.u32 %v541, 4294901760
    %543 = vmatpush.msra.mxu0 %v542
    %v544 = vand.u32 %v91, 4294901760
    %v545 = vsub.f32 %v91, %v544
    %v546 = vand.u32 %v545, 4294901760
    %v547 = vsub.f32 %v545, %v546
    %v548 = vand.u32 %v547, 4294901760
    %549 = vmatpush.msra.mxu0 %v548
    %v550 = vand.u32 %v89, 4294901760
    %v551 = vsub.f32 %v89, %v550
    %v552 = vand.u32 %v551, 4294901760
    %v553 = vsub.f32 %v551, %v552
    %v554 = vand.u32 %v553, 4294901760
    %555 = vmatpush.msra.mxu0 %v554
    %v556 = vand.u32 %v87, 4294901760
    %v557 = vsub.f32 %v87, %v556
    %v558 = vand.u32 %v557, 4294901760
    %v559 = vsub.f32 %v557, %v558
    %v560 = vand.u32 %v559, 4294901760
    %561 = vmatpush.msra.mxu0 %v560
    %v562 = vand.u32 %v85, 4294901760
    %v563 = vsub.f32 %v85, %v562
    %v564 = vand.u32 %v563, 4294901760
    %v565 = vsub.f32 %v563, %v564
    %v566 = vand.u32 %v565, 4294901760
    %567 = vmatpush.msra.mxu0 %v566
    %v568 = vand.u32 %v83, 4294901760
    %v569 = vsub.f32 %v83, %v568
    %v570 = vand.u32 %v569, 4294901760
    %v571 = vsub.f32 %v569, %v570
    %v572 = vand.u32 %v571, 4294901760
    %573 = vmatpush.msra.mxu0 %v572
    %v574 = vand.u32 %v81, 4294901760
    %v575 = vsub.f32 %v81, %v574
    %v576 = vand.u32 %v575, 4294901760
    %v577 = vsub.f32 %v575, %v576
    %v578 = vand.u32 %v577, 4294901760
    %579 = vmatpush.msra.mxu0 %v578
    %v580 = vand.u32 %v79, 4294901760
    %v581 = vsub.f32 %v79, %v580
    %v582 = vand.u32 %v581, 4294901760
    %v583 = vsub.f32 %v581, %v582
    %v584 = vand.u32 %v583, 4294901760
    %585 = vmatpush.msra.mxu0 %v584
    %v586 = vand.u32 %v77, 4294901760
    %v587 = vsub.f32 %v77, %v586
    %v588 = vand.u32 %v587, 4294901760
    %v589 = vsub.f32 %v587, %v588
    %v590 = vand.u32 %v589, 4294901760
    %591 = vmatpush.msra.mxu0 %v590
    %v592 = vand.u32 %v75, 4294901760
    %593 = vmatmul.f32.gmra.mxu0 %v592
    %v594 = vpop.f32.mrf.mxu0
    %v595 = vadd.f32 %v494, %v594
    %596 = vdwg.mxu0
    %v597 = vand.u32 %v107, 4294901760
    %v598 = vsub.f32 %v107, %v597
    %599 = vmatpush.msra.mxu0 %v598
    %v600 = vand.u32 %v105, 4294901760
    %v601 = vsub.f32 %v105, %v600
    %602 = vmatpush.msra.mxu0 %v601
    %v603 = vand.u32 %v103, 4294901760
    %v604 = vsub.f32 %v103, %v603
    %605 = vmatpush.msra.mxu0 %v604
    %v606 = vand.u32 %v101, 4294901760
    %v607 = vsub.f32 %v101, %v606
    %608 = vmatpush.msra.mxu0 %v607
    %v609 = vand.u32 %v99, 4294901760
    %v610 = vsub.f32 %v99, %v609
    %611 = vmatpush.msra.mxu0 %v610
    %v612 = vand.u32 %v97, 4294901760
    %v613 = vsub.f32 %v97, %v612
    %614 = vmatpush.msra.mxu0 %v613
    %v615 = vand.u32 %v95, 4294901760
    %v616 = vsub.f32 %v95, %v615
    %617 = vmatpush.msra.mxu0 %v616
    %v618 = vand.u32 %v93, 4294901760
    %v619 = vsub.f32 %v93, %v618
    %620 = vmatpush.msra.mxu0 %v619
    %v621 = vand.u32 %v91, 4294901760
    %v622 = vsub.f32 %v91, %v621
    %623 = vmatpush.msra.mxu0 %v622
    %v624 = vand.u32 %v89, 4294901760
    %v625 = vsub.f32 %v89, %v624
    %626 = vmatpush.msra.mxu0 %v625
    %v627 = vand.u32 %v87, 4294901760
    %v628 = vsub.f32 %v87, %v627
    %629 = vmatpush.msra.mxu0 %v628
    %v630 = vand.u32 %v85, 4294901760
    %v631 = vsub.f32 %v85, %v630
    %632 = vmatpush.msra.mxu0 %v631
    %v633 = vand.u32 %v83, 4294901760
    %v634 = vsub.f32 %v83, %v633
    %635 = vmatpush.msra.mxu0 %v634
    %v636 = vand.u32 %v81, 4294901760
    %v637 = vsub.f32 %v81, %v636
    %638 = vmatpush.msra.mxu0 %v637
    %v639 = vand.u32 %v79, 4294901760
    %v640 = vsub.f32 %v79, %v639
    %641 = vmatpush.msra.mxu0 %v640
    %v642 = vand.u32 %v77, 4294901760
    %v643 = vsub.f32 %v77, %v642
    %644 = vmatpush.msra.mxu0 %v643
    %v645 = vand.u32 %v75, 4294901760
    %v646 = vsub.f32 %v75, %v645
    %647 = vmatmul.f32.gmra.mxu0 %v646
    %v648 = vpop.f32.mrf.mxu0
    %v649 = vadd.f32 %v595, %v648
    %650 = vdwg.mxu0
    %v651 = vand.u32 %v107, 4294901760
    %652 = vmatpush.msra.mxu0 %v651
    %v653 = vand.u32 %v105, 4294901760
    %654 = vmatpush.msra.mxu0 %v653
    %v655 = vand.u32 %v103, 4294901760
    %656 = vmatpush.msra.mxu0 %v655
    %v657 = vand.u32 %v101, 4294901760
    %658 = vmatpush.msra.mxu0 %v657
    %v659 = vand.u32 %v99, 4294901760
    %660 = vmatpush.msra.mxu0 %v659
    %v661 = vand.u32 %v97, 4294901760
    %662 = vmatpush.msra.mxu0 %v661
    %v663 = vand.u32 %v95, 4294901760
    %664 = vmatpush.msra.mxu0 %v663
    %v665 = vand.u32 %v93, 4294901760
    %666 = vmatpush.msra.mxu0 %v665
    %v667 = vand.u32 %v91, 4294901760
    %668 = vmatpush.msra.mxu0 %v667
    %v669 = vand.u32 %v89, 4294901760
    %670 = vmatpush.msra.mxu0 %v669
    %v671 = vand.u32 %v87, 4294901760
    %672 = vmatpush.msra.mxu0 %v671
    %v673 = vand.u32 %v85, 4294901760
    %674 = vmatpush.msra.mxu0 %v673
    %v675 = vand.u32 %v83, 4294901760
    %676 = vmatpush.msra.mxu0 %v675
    %v677 = vand.u32 %v81, 4294901760
    %678 = vmatpush.msra.mxu0 %v677
    %v679 = vand.u32 %v79, 4294901760
    %680 = vmatpush.msra.mxu0 %v679
    %v681 = vand.u32 %v77, 4294901760
    %682 = vmatpush.msra.mxu0 %v681
    %v683 = vand.u32 %v75, 4294901760
    %v684 = vsub.f32 %v75, %v683
    %v685 = vand.u32 %v684, 4294901760
    %686 = vmatmul.f32.gmra.mxu0 %v685
    %v687 = vpop.f32.mrf.mxu0
    %v688 = vadd.f32 %v649, %v687
    %689 = vdwg.mxu0
    %v690 = vand.u32 %v107, 4294901760
    %v691 = vsub.f32 %v107, %v690
    %v692 = vand.u32 %v691, 4294901760
    %693 = vmatpush.msra.mxu0 %v692
    %v694 = vand.u32 %v105, 4294901760
    %v695 = vsub.f32 %v105, %v694
    %v696 = vand.u32 %v695, 4294901760
    %697 = vmatpush.msra.mxu0 %v696
    %v698 = vand.u32 %v103, 4294901760
    %v699 = vsub.f32 %v103, %v698
    %v700 = vand.u32 %v699, 4294901760
    %701 = vmatpush.msra.mxu0 %v700
    %v702 = vand.u32 %v101, 4294901760
    %v703 = vsub.f32 %v101, %v702
    %v704 = vand.u32 %v703, 4294901760
    %705 = vmatpush.msra.mxu0 %v704
    %v706 = vand.u32 %v99, 4294901760
    %v707 = vsub.f32 %v99, %v706
    %v708 = vand.u32 %v707, 4294901760
    %709 = vmatpush.msra.mxu0 %v708
    %v710 = vand.u32 %v97, 4294901760
    %v711 = vsub.f32 %v97, %v710
    %v712 = vand.u32 %v711, 4294901760
    %713 = vmatpush.msra.mxu0 %v712
    %v714 = vand.u32 %v95, 4294901760
    %v715 = vsub.f32 %v95, %v714
    %v716 = vand.u32 %v715, 4294901760
    %717 = vmatpush.msra.mxu0 %v716
    %v718 = vand.u32 %v93, 4294901760
    %v719 = vsub.f32 %v93, %v718
    %v720 = vand.u32 %v719, 4294901760
    %721 = vmatpush.msra.mxu0 %v720
    %v722 = vand.u32 %v91, 4294901760
    %v723 = vsub.f32 %v91, %v722
    %v724 = vand.u32 %v723, 4294901760
    %725 = vmatpush.msra.mxu0 %v724
    %v726 = vand.u32 %v89, 4294901760
    %v727 = vsub.f32 %v89, %v726
    %v728 = vand.u32 %v727, 4294901760
    %729 = vmatpush.msra.mxu0 %v728
    %v730 = vand.u32 %v87, 4294901760
    %v731 = vsub.f32 %v87, %v730
    %v732 = vand.u32 %v731, 4294901760
    %733 = vmatpush.msra.mxu0 %v732
    %v734 = vand.u32 %v85, 4294901760
    %v735 = vsub.f32 %v85, %v734
    %v736 = vand.u32 %v735, 4294901760
    %737 = vmatpush.msra.mxu0 %v736
    %v738 = vand.u32 %v83, 4294901760
    %v739 = vsub.f32 %v83, %v738
    %v740 = vand.u32 %v739, 4294901760
    %741 = vmatpush.msra.mxu0 %v740
    %v742 = vand.u32 %v81, 4294901760
    %v743 = vsub.f32 %v81, %v742
    %v744 = vand.u32 %v743, 4294901760
    %745 = vmatpush.msra.mxu0 %v744
    %v746 = vand.u32 %v79, 4294901760
    %v747 = vsub.f32 %v79, %v746
    %v748 = vand.u32 %v747, 4294901760
    %749 = vmatpush.msra.mxu0 %v748
    %v750 = vand.u32 %v77, 4294901760
    %v751 = vsub.f32 %v77, %v750
    %v752 = vand.u32 %v751, 4294901760
    %753 = vmatpush.msra.mxu0 %v752
    %v754 = vand.u32 %v75, 4294901760
    %755 = vmatmul.f32.gmra.mxu0 %v754
    %v756 = vpop.f32.mrf.mxu0
    %v757 = vadd.f32 %v688, %v756
    %758 = vdwg.mxu0
    %v759 = vand.u32 %v107, 4294901760
    %760 = vmatpush.msra.mxu0 %v759
    %v761 = vand.u32 %v105, 4294901760
    %762 = vmatpush.msra.mxu0 %v761
    %v763 = vand.u32 %v103, 4294901760
    %764 = vmatpush.msra.mxu0 %v763
    %v765 = vand.u32 %v101, 4294901760
    %766 = vmatpush.msra.mxu0 %v765
    %v767 = vand.u32 %v99, 4294901760
    %768 = vmatpush.msra.mxu0 %v767
    %v769 = vand.u32 %v97, 4294901760
    %770 = vmatpush.msra.mxu0 %v769
    %v771 = vand.u32 %v95, 4294901760
    %772 = vmatpush.msra.mxu0 %v771
    %v773 = vand.u32 %v93, 4294901760
    %774 = vmatpush.msra.mxu0 %v773
    %v775 = vand.u32 %v91, 4294901760
    %776 = vmatpush.msra.mxu0 %v775
    %v777 = vand.u32 %v89, 4294901760
    %778 = vmatpush.msra.mxu0 %v777
    %v779 = vand.u32 %v87, 4294901760
    %780 = vmatpush.msra.mxu0 %v779
    %v781 = vand.u32 %v85, 4294901760
    %782 = vmatpush.msra.mxu0 %v781
    %v783 = vand.u32 %v83, 4294901760
    %784 = vmatpush.msra.mxu0 %v783
    %v785 = vand.u32 %v81, 4294901760
    %786 = vmatpush.msra.mxu0 %v785
    %v787 = vand.u32 %v79, 4294901760
    %788 = vmatpush.msra.mxu0 %v787
    %v789 = vand.u32 %v77, 4294901760
    %790 = vmatpush.msra.mxu0 %v789
    %v791 = vand.u32 %v75, 4294901760
    %792 = vmatmul.f32.gmra.mxu0 %v791
    %v793 = vpop.f32.mrf.mxu0
    %v794 = vadd.f32 %v757, %v793
    %795 = vdwg.mxu0
    %796 = vst [vmem:[#allocation5] sm:$0xff] %v453
    %797 = vst [vmem:[#allocation5 + $0x8] sm:$0xff] %v794
    // Predicated region
    $region26: #{dqn_forward.1} parent=1 // pred_check
      _
    $region27: #{dqn_forward.1} parent=1 // pred_check_branch
      %799 = sbr.rel (0) target = $region29
    $region28: #{dqn_forward.1} parent=1 // pred_region
      %801 = vsyncadd [#allocation4], 0
      %s803 = sshll.u32 [#allocation5], 4
      %s804 = int_to_ptr.vmem [resolvable:$true] %s803
      %s805 = sshll.u32 %s5, 4
      %s806 = int_to_ptr.hbm [resolvable:$true] %s805
      %808 = dma.vmem_to_hbm [thread:$0]  %s804, 256, %s806, [#allocation4]
    $region29: #{dqn_forward.1} parent=1 // pred_fallthru
      _
    // Predicated region
    $region30: #{dqn_forward.1} parent=1 // pred_check
      _
    $region31: #{dqn_forward.1} parent=1 // pred_check_branch
      %810 = sbr.rel (0) target = $region33
    $region32: #{dqn_forward.1} parent=1 // pred_region
      %812 = dma.done [#allocation4], 256
    $region33: #{dqn_forward.1} parent=1 // pred_fallthru
      _
    %813 = vsyncpa [#allocation3], 1
    %814 = vsyncpa [#allocation4], 1

</llo_original>
